<compile_context>
chip_gen: v7x
topology: tpu7x:2x2x1
jax: 0.10.0
libtpu: 0.0.40
codegen_flags: <defaults>
</compile_context>

<pallas_src>
import functools

import jax
import jax.numpy as jnp
from jax.experimental import pallas as pl
from jax.experimental.pallas import tpu as pltpu


def _sublayer_connection_kernel(x_ref, w_ref, a_ref, b_ref, o_ref, *, eps):
    # Load the (tm, D) activation tile in f32.
    x = x_ref[...].astype(jnp.float32)                          # (tm, D)
    d = x.shape[-1]

    # ---- LayerNorm (PyTorch: mean / unbiased std, eps added to std) ----
    mean = jnp.mean(x, axis=-1, keepdims=True)                  # (tm, 1)
    centered = x - mean
    var_unbiased = jnp.sum(centered * centered, axis=-1, keepdims=True) / (d - 1)
    std = jnp.sqrt(var_unbiased)                                # (tm, 1)
    # One reciprocal per row (EUP) + a VPU multiply, instead of D divides/row.
    # approx=False keeps the result numerically equal to the divide.
    inv = pl.reciprocal(std + eps, approx=False)                # (tm, 1)
    normed = (a_ref[...].astype(jnp.float32) * (centered * inv)
              + b_ref[...].astype(jnp.float32))                 # (tm, D)

    # ---- sublayer: dense projection on the MXU (bf16 in, f32 accumulate) ----
    y = jnp.dot(normed.astype(jnp.bfloat16), w_ref[...],
                preferred_element_type=jnp.float32)             # (tm, D)

    # ---- dropout (eval mode -> identity) + residual ----
    o_ref[...] = (x + y).astype(o_ref.dtype)


def sublayer_connection(x, w, a_2, b_2, *, eps=1e-6, tm_max=512):
    """x: (B, S, D); w: (D, D); a_2, b_2: (D,). Returns (B, S, D)."""
    B, S, D = x.shape
    M = B * S
    x2d = x.reshape(M, D)
    a2d = a_2.reshape(1, D)
    b2d = b_2.reshape(1, D)
    w_bf16 = w.astype(jnp.bfloat16)   # halve W's DMA/VMEM footprint, MXU-native

    # Row-tile size: big enough to amortize per-step overhead / hit the HBM
    # roofline, but never larger than the slab itself.  tm is either == M
    # (full dim) or a multiple of 8, so the (8, 128) block constraint holds.
    tm = M if M <= tm_max else tm_max
    grid = (pl.cdiv(M, tm),)

    # VMEM budget: double-buffered x + out tiles, W (bf16, conservatively
    # counted twice), and the tiny scale/shift rows.
    vmem_needed = (2 * tm * D * 4          # x tiles (f32, double-buffered)
                   + 2 * tm * D * 4        # out tiles (f32, double-buffered)
                   + 2 * D * D * 2         # W (bf16)
                   + 2 * 2 * D * 4)        # a_2 / b_2
    vmem_limit = int(min(max(2 * vmem_needed, 32 * 1024 * 1024),
                         96 * 1024 * 1024))

    kernel = functools.partial(_sublayer_connection_kernel, eps=eps)

    out2d = pl.pallas_call(
        kernel,
        out_shape=jax.ShapeDtypeStruct((M, D), x.dtype),
        grid_spec=pltpu.PrefetchScalarGridSpec(
            num_scalar_prefetch=0,
            grid=grid,
            in_specs=[
                pl.BlockSpec((tm, D), lambda i: (i, 0)),   # x (row tile)
                pl.BlockSpec((D, D), lambda i: (0, 0)),    # W (resident)
                pl.BlockSpec((1, D), lambda i: (0, 0)),    # a_2 (scale)
                pl.BlockSpec((1, D), lambda i: (0, 0)),    # b_2 (shift)
            ],
            out_specs=pl.BlockSpec((tm, D), lambda i: (i, 0)),
        ),
        compiler_params=pltpu.CompilerParams(
            # Row tiles are independent -> shard across TensorCores on v7x.
            dimension_semantics=("parallel",),
            vmem_limit_bytes=vmem_limit,
        ),
    )(x2d, w_bf16, a2d, b2d)

    return out2d.reshape(B, S, D)


def _reference(x, w, a_2, b_2, eps=1e-6):
    """Pure-JAX reference matching the kernel's numerics (bf16 MXU inputs)."""
    xf = x.astype(jnp.float32)
    mean = jnp.mean(xf, axis=-1, keepdims=True)
    centered = xf - mean
    d = xf.shape[-1]
    std = jnp.sqrt(jnp.sum(centered * centered, axis=-1, keepdims=True) / (d - 1))
    normed = a_2 * (centered * (1.0 / (std + eps))) + b_2
    y = jnp.dot(normed.astype(jnp.bfloat16), w.astype(jnp.bfloat16),
                preferred_element_type=jnp.float32)
    return (xf + y).astype(x.dtype)


if __name__ == "__main__":
    # Small but lane-dense test shape: D is a multiple of 128 so stores use
    # the unmasked vst path (the production-representative layout).
    B, S, D = 2, 8, 128

    key = jax.random.PRNGKey(0)
    kx, kw = jax.random.split(key)

    x = jax.random.normal(kx, (B, S, D), dtype=jnp.float32)
    # Deterministic parameter init (module __init__ shapes):
    a_2 = jnp.ones((D,), dtype=jnp.float32)    # LayerNorm scale
    b_2 = jnp.zeros((D,), dtype=jnp.float32)   # LayerNorm shift
    # Synthetic sublayer (dense projection), deterministic init.
    w = jax.random.normal(kw, (D, D), dtype=jnp.float32) * (1.0 / jnp.sqrt(D))

    out = sublayer_connection(x, w, a_2, b_2)
    out = jax.block_until_ready(out)

    ref = _reference(x, w, a_2, b_2)
    assert out.shape == (B, S, D)
    assert jnp.allclose(out, ref, atol=5e-3, rtol=5e-3), "mismatch vs reference"

    print("KERNEL_OK")
</pallas_src>

<mosaic_0001>
module attributes {stable_mosaic.version = 11 : i64} {
  func.func @_sublayer_connection_kernel(%arg0: i32, %arg1: memref<16x128xf32, #tpu.memory_space<vmem>>, %arg2: memref<128x128xbf16, #tpu.memory_space<vmem>>, %arg3: memref<1x128xf32, #tpu.memory_space<vmem>>, %arg4: memref<1x128xf32, #tpu.memory_space<vmem>>, %arg5: memref<16x128xf32, #tpu.memory_space<vmem>>) attributes {dimension_semantics = [#tpu.dimension_semantics<parallel>], iteration_bounds = array<i64: 1>, scalar_prefetch = 0 : i64, scratch_operands = 0 : i64, tpu.core_type = #tpu.core_type<tc>, window_params = [{transform_indices = @transform_0, window_bounds = array<i64: 16, 128>}, {pipeline_mode = #tpu.pipeline_mode<synchronous>, transform_indices = @transform_1, window_bounds = array<i64: 128, 128>}, {pipeline_mode = #tpu.pipeline_mode<synchronous>, transform_indices = @transform_2, window_bounds = array<i64: 1, 128>}, {pipeline_mode = #tpu.pipeline_mode<synchronous>, transform_indices = @transform_3, window_bounds = array<i64: 1, 128>}, {transform_indices = @transform_4, window_bounds = array<i64: 16, 128>}]} {
    %c0 = arith.constant 0 : index
    %c0_0 = arith.constant 0 : index
    %0 = vector.load %arg1[%c0, %c0_0] : memref<16x128xf32, #tpu.memory_space<vmem>>, vector<16x128xf32>
    %cst = arith.constant dense<0.000000e+00> : vector<16xf32>
    %1 = vector.multi_reduction <add>, %0, %cst [1] : vector<16x128xf32> to vector<16xf32>
    %2 = vector.shape_cast %1 : vector<16xf32> to vector<16x1xf32>
    %cst_1 = arith.constant 1.280000e+02 : f32
    %3 = vector.broadcast %cst_1 : f32 to vector<16x1xf32>
    %4 = arith.divf %2, %3 : vector<16x1xf32>
    %5 = vector.broadcast %4 : vector<16x1xf32> to vector<16x128xf32>
    %6 = arith.subf %0, %5 : vector<16x128xf32>
    %7 = arith.mulf %6, %6 : vector<16x128xf32>
    %cst_2 = arith.constant dense<0.000000e+00> : vector<16xf32>
    %8 = vector.multi_reduction <add>, %7, %cst_2 [1] : vector<16x128xf32> to vector<16xf32>
    %9 = vector.shape_cast %8 : vector<16xf32> to vector<16x1xf32>
    %cst_3 = arith.constant 1.270000e+02 : f32
    %10 = vector.broadcast %cst_3 : f32 to vector<16x1xf32>
    %11 = arith.divf %9, %10 : vector<16x1xf32>
    %12 = math.sqrt %11 : vector<16x1xf32>
    %cst_4 = arith.constant 9.99999997E-7 : f32
    %13 = vector.broadcast %cst_4 : f32 to vector<16x1xf32>
    %14 = arith.addf %12, %13 : vector<16x1xf32>
    %15 = tpu.reciprocal %14 : vector<16x1xf32> -> vector<16x1xf32>
    %c0_5 = arith.constant 0 : index
    %c0_6 = arith.constant 0 : index
    %16 = vector.load %arg3[%c0_5, %c0_6] : memref<1x128xf32, #tpu.memory_space<vmem>>, vector<1x128xf32>
    %17 = vector.broadcast %15 : vector<16x1xf32> to vector<16x128xf32>
    %18 = arith.mulf %6, %17 : vector<16x128xf32>
    %19 = vector.broadcast %16 : vector<1x128xf32> to vector<16x128xf32>
    %20 = arith.mulf %19, %18 : vector<16x128xf32>
    %c0_7 = arith.constant 0 : index
    %c0_8 = arith.constant 0 : index
    %21 = vector.load %arg4[%c0_7, %c0_8] : memref<1x128xf32, #tpu.memory_space<vmem>>, vector<1x128xf32>
    %22 = vector.broadcast %21 : vector<1x128xf32> to vector<16x128xf32>
    %23 = arith.addf %20, %22 : vector<16x128xf32>
    %24 = arith.truncf %23 : vector<16x128xf32> to vector<16x128xbf16>
    %c0_9 = arith.constant 0 : index
    %c0_10 = arith.constant 0 : index
    %25 = vector.load %arg2[%c0_9, %c0_10] : memref<128x128xbf16, #tpu.memory_space<vmem>>, vector<128x128xbf16>
    %cst_11 = arith.constant dense<0.000000e+00> : vector<16x128xf32>
    %26 = tpu.matmul %24, %25, %cst_11 {dimension_numbers = #tpu.dot_dimension_numbers<[1], [0], [0], [1], [0, 0, 1, 1], [], []>} : vector<16x128xbf16>, vector<128x128xbf16>, vector<16x128xf32> -> vector<16x128xf32>
    %27 = arith.addf %0, %26 : vector<16x128xf32>
    %c0_12 = arith.constant 0 : index
    %c0_13 = arith.constant 0 : index
    %28 = vector.load %arg5[%c0_12, %c0_13] : memref<16x128xf32, #tpu.memory_space<vmem>>, vector<16x128xf32>
    tpu.vector_store %arg5[%c0_12, %c0_13], %27 {strides = array<i32>} : memref<16x128xf32, #tpu.memory_space<vmem>>, vector<16x128xf32>,
    return
  }
  func.func @transform_0(%arg0: i32) -> (i32, i32) {
    %c0_i32 = arith.constant 0 : i32
    %c0_i32_0 = arith.constant 0 : i32
    return %arg0, %c0_i32 : i32, i32
  }
  func.func @transform_1(%arg0: i32) -> (i32, i32) {
    %c0_i32 = arith.constant 0 : i32
    %c0_i32_0 = arith.constant 0 : i32
    %c0_i32_1 = arith.constant 0 : i32
    return %c0_i32, %c0_i32_0 : i32, i32
  }
  func.func @transform_2(%arg0: i32) -> (i32, i32) {
    %c0_i32 = arith.constant 0 : i32
    %c0_i32_0 = arith.constant 0 : i32
    %c0_i32_1 = arith.constant 0 : i32
    return %c0_i32, %c0_i32_0 : i32, i32
  }
  func.func @transform_3(%arg0: i32) -> (i32, i32) {
    %c0_i32 = arith.constant 0 : i32
    %c0_i32_0 = arith.constant 0 : i32
    %c0_i32_1 = arith.constant 0 : i32
    return %c0_i32, %c0_i32_0 : i32, i32
  }
  func.func @transform_4(%arg0: i32) -> (i32, i32) {
    %c0_i32 = arith.constant 0 : i32
    %c0_i32_0 = arith.constant 0 : i32
    return %arg0, %c0_i32 : i32, i32
  }
}

</mosaic_0001>

<llo_original>
// kernel: tpu_custom_call.1
$region0: #{tpu_custom_call.1}
  #allocation0 [shape = 'u32[]', space=smem, size = 0x4, offset = 0x4, fixed_abs, tag = 'smem constant byte address 0x4 - core index']
  #allocation1 [shape = 'u32[144,128]{1,0:T(1,128)}', space=vmem, size = 0x12000, scoped, tag = 'internal scratch']
  %s0 = inlined_call_operand.hbm [shape: f32[16,128], index: 0, kind: input, shape index: {}]
  %s1 = inlined_call_operand.hbm [shape: bf16[128,128], index: 1, kind: input, shape index: {}]
  %s2 = inlined_call_operand.vmem [shape: f32[1,128], index: 2, kind: input, shape index: {}]
  %s3 = inlined_call_operand.vmem [shape: f32[1,128], index: 3, kind: input, shape index: {}]
  %s4 = inlined_call_operand.hbm [shape: f32[16,128], index: 4, kind: output, shape index: {}]
  %s5 = sld [smem:[#allocation0]]
  $region34: #{tpu_custom_call.1} parent=0
    _
  %s7 = ssub.s32 1, %s5
  %s8 = scalar_select 0, %s7, %s5
  $region1: #{tpu_custom_call.1} parent=0
    #allocation2 [shape = 'u8[8192]{0}', space=vmem, size = 0x2000, scoped, tag = 'input window, operand 0, single buffered']
    #allocation3 [shape = 's32[1]{0}', space=sflag, size = 0x4, scoped, tag = 'scoped memory for tpu_custom_call.1']
    #allocation4 [shape = 's32[1]{0}', space=sflag, size = 0x4, scoped, tag = 'scoped memory for tpu_custom_call.1']
    #allocation5 [shape = 'u8[32768]{0}', space=vmem, size = 0x8000, scoped, tag = 'input window, operand 1, single buffered']
    #allocation6 [shape = 's32[1]{0}', space=sflag, size = 0x4, scoped, tag = 'scoped memory for tpu_custom_call.1']
    #allocation7 [shape = 'u8[8192]{0}', space=vmem, size = 0x2000, scoped, tag = 'output window, operand 0, single buffered']
    %9 = vsyncpa [#allocation3], 0
    %10 = vsyncpa [#allocation6], 0
    %11 = vsyncpa [#allocation4], 0
    // Predicated region
    $region2: #{tpu_custom_call.1} parent=1 // pred_check
      _
    $region3: #{tpu_custom_call.1} parent=1 // pred_check_branch
      %13 = sbr.rel (0) target = $region5
    $region4: #{tpu_custom_call.1} parent=1 // pred_region
      %s15 = ssub.s32 256, 256
      %16 = vsyncadd [#allocation3], %s15
      %s17 = sshll.u32 [#allocation2], 4
      %s18 = int_to_ptr.vmem [resolvable:$true] %s17
      %23 = dma.hbm_to_vmem [thread:$0]  %s0, 256, %s18, [#allocation3], 128, 128, 8
    $region5: #{tpu_custom_call.1} parent=1 // pred_fallthru
      _
    // Predicated region
    $region6: #{tpu_custom_call.1} parent=1 // pred_check
      _
    $region7: #{tpu_custom_call.1} parent=1 // pred_check_branch
      %25 = sbr.rel (0) target = $region9
    $region8: #{tpu_custom_call.1} parent=1 // pred_region
      %s27 = ssub.s32 1024, 1024
      %28 = vsyncadd [#allocation6], %s27
      %s29 = sshll.u32 [#allocation5], 4
      %s30 = int_to_ptr.vmem [resolvable:$true] %s29
      %35 = dma.hbm_to_vmem [thread:$0]  %s1, 1024, %s30, [#allocation6], 64, 64, 4
    $region9: #{tpu_custom_call.1} parent=1 // pred_fallthru
      _
    // Predicated region
    $region10: #{tpu_custom_call.1} parent=1 // pred_check
      _
    $region11: #{tpu_custom_call.1} parent=1 // pred_check_branch
      %37 = sbr.rel (0) target = $region13
    $region12: #{tpu_custom_call.1} parent=1 // pred_region
      _
    $region13: #{tpu_custom_call.1} parent=1 // pred_fallthru
      _
    // Predicated region
    $region14: #{tpu_custom_call.1} parent=1 // pred_check
      _
    $region15: #{tpu_custom_call.1} parent=1 // pred_check_branch
      %39 = sbr.rel (0) target = $region17
    $region16: #{tpu_custom_call.1} parent=1 // pred_region
      _
    $region17: #{tpu_custom_call.1} parent=1 // pred_fallthru
      _
    // Predicated region
    $region18: #{tpu_custom_call.1} parent=1 // pred_check
      _
    $region19: #{tpu_custom_call.1} parent=1 // pred_check_branch
      %41 = sbr.rel (0) target = $region21
    $region20: #{tpu_custom_call.1} parent=1 // pred_region
      %42 = dma.done [#allocation3], 256
    $region21: #{tpu_custom_call.1} parent=1 // pred_fallthru
      _
    // Predicated region
    $region22: #{tpu_custom_call.1} parent=1 // pred_check
      _
    $region23: #{tpu_custom_call.1} parent=1 // pred_check_branch
      %44 = sbr.rel (0) target = $region25
    $region24: #{tpu_custom_call.1} parent=1 // pred_region
      %45 = dma.done [#allocation6], 1024
    $region25: #{tpu_custom_call.1} parent=1 // pred_fallthru
      _
    %v47 = vld [vmem:[#allocation2] sm:$0xff]
    %v48 = vld [vmem:[#allocation2 + $0x8] sm:$0xff]
    %49 = vadd.xlane.f32.xlu0 %v47
    %v50 = vpop.xlane.xlu0 %49
    %51 = vadd.xlane.f32.xlu0 %v48
    %v52 = vpop.xlane.xlu0 %51
    %v53 = vrcp.pop 128.0
    %v54 = vmul.f32 %v50, %v53
    %v55 = vmul.f32 %v52, %v53
    %v56 = vsub.f32 %v47, %v54
    %v57 = vsub.f32 %v48, %v55
    %v58 = vmul.f32 %v56, %v56
    %v59 = vmul.f32 %v57, %v57
    %60 = vadd.xlane.f32.xlu0 %v58
    %v61 = vpop.xlane.xlu0 %60
    %62 = vadd.xlane.f32.xlu0 %v59
    %v63 = vpop.xlane.xlu0 %62
    %v64 = vrcp.pop 127.0
    %v65 = vmul.f32 %v61, %v64
    %v66 = vmul.f32 %v63, %v64
    %v67 = vrsqrt.pop %v65
    %v68 = vmul.f32 %v65, %v67
    %vm69 = vcmp.eq.f32.partialorder %v65, inf
    %v70 = vsel %vm69, %v65, %v68
    %vm71 = vcmp.eq.f32.partialorder %v65, 0.0
    %v72 = vand.u32 %v65, 2147483648
    %v73 = vsel %vm71, %v72, %v70
    %v74 = vrsqrt.pop %v66
    %v75 = vmul.f32 %v66, %v74
    %vm76 = vcmp.eq.f32.partialorder %v66, inf
    %v77 = vsel %vm76, %v66, %v75
    %vm78 = vcmp.eq.f32.partialorder %v66, 0.0
    %v79 = vand.u32 %v66, 2147483648
    %v80 = vsel %vm78, %v79, %v77
    %v81 = vadd.f32 %v73, 1e-06
    %v82 = vadd.f32 %v80, 1e-06
    %v83 = vrcp.pop %v81
    %v84 = vrcp.pop %v82
    %v85 = vld [vmem:[%s2] sm:$0x1]
    %v86 = vmul.f32 %v56, %v83
    %v87 = vmul.f32 %v57, %v84
    %v89 = vlaneseq
    %v90 = vshrl.u32 %v89, 7
    %v91 = vsub.s32 0, %v90
    %v92 = vrot.slane %v85, %v91
    %v94 = vmul.f32 %v92, %v86
    %v95 = vmul.f32 %v92, %v87
    %v96 = vld [vmem:[%s3] sm:$0x1]
    %v98 = vlaneseq
    %v99 = vshrl.u32 %v98, 7
    %v100 = vsub.s32 0, %v99
    %v101 = vrot.slane %v96, %v100
    %v103 = vadd.f32 %v94, %v101
    %v104 = vadd.f32 %v95, %v101
    %v105 = vpack.c.bf16 %v104, %v103
    %v106 = vld [vmem:[#allocation5] sm:$0xf]
    %v107 = vld [vmem:[#allocation5 + $0x4] sm:$0xf]
    %v108 = vld [vmem:[#allocation5 + $0x8] sm:$0xf]
    %v109 = vld [vmem:[#allocation5 + $0xc] sm:$0xf]
    %v110 = vld [vmem:[#allocation5 + $0x10] sm:$0xf]
    %v111 = vld [vmem:[#allocation5 + $0x14] sm:$0xf]
    %v112 = vld [vmem:[#allocation5 + $0x18] sm:$0xf]
    %v113 = vld [vmem:[#allocation5 + $0x1c] sm:$0xf]
    %v114 = vld [vmem:[#allocation5 + $0x20] sm:$0xf]
    %v115 = vld [vmem:[#allocation5 + $0x24] sm:$0xf]
    %v116 = vld [vmem:[#allocation5 + $0x28] sm:$0xf]
    %v117 = vld [vmem:[#allocation5 + $0x2c] sm:$0xf]
    %v118 = vld [vmem:[#allocation5 + $0x30] sm:$0xf]
    %v119 = vld [vmem:[#allocation5 + $0x34] sm:$0xf]
    %v120 = vld [vmem:[#allocation5 + $0x38] sm:$0xf]
    %v121 = vld [vmem:[#allocation5 + $0x3c] sm:$0xf]
    %v138 = vunpack.c.l.b16 %v106
    %v139 = vunpack.c.l.b16 %v107
    %v140 = vunpack.c.l.b16 %v108
    %v141 = vunpack.c.l.b16 %v109
    %v142 = vunpack.c.l.b16 %v110
    %v143 = vunpack.c.l.b16 %v111
    %v144 = vunpack.c.l.b16 %v112
    %v145 = vunpack.c.l.b16 %v113
    %v146 = vunpack.c.l.b16 %v114
    %v147 = vunpack.c.l.b16 %v115
    %v148 = vunpack.c.l.b16 %v116
    %v149 = vunpack.c.l.b16 %v117
    %v150 = vunpack.c.l.b16 %v118
    %v151 = vunpack.c.l.b16 %v119
    %v152 = vunpack.c.l.b16 %v120
    %v153 = vunpack.c.l.b16 %v121
    %v154 = vpack.c.b16 %v139, %v138
    %v155 = vpack.c.b16 %v141, %v140
    %v156 = vpack.c.b16 %v143, %v142
    %v157 = vpack.c.b16 %v145, %v144
    %v158 = vpack.c.b16 %v147, %v146
    %v159 = vpack.c.b16 %v149, %v148
    %v160 = vpack.c.b16 %v151, %v150
    %v161 = vpack.c.b16 %v153, %v152
    %170 = vmatprep.subr.bf16.mxu0 0
    %171 = vmatpush1.bf16.msra.mxu0 %v154
    %172 = vmatprep.subr.bf16.mxu0 0
    %173 = vmatpush1.bf16.msra.mxu0 %v155
    %174 = vmatprep.subr.bf16.mxu0 0
    %175 = vmatpush1.bf16.msra.mxu0 %v156
    %176 = vmatprep.subr.bf16.mxu0 0
    %177 = vmatpush1.bf16.msra.mxu0 %v157
    %178 = vmatprep.subr.bf16.mxu0 0
    %179 = vmatpush1.bf16.msra.mxu0 %v158
    %180 = vmatprep.subr.bf16.mxu0 0
    %181 = vmatpush1.bf16.msra.mxu0 %v159
    %182 = vmatprep.subr.bf16.mxu0 0
    %183 = vmatpush1.bf16.msra.mxu0 %v160
    %184 = vmatprep.subr.bf16.mxu0 0
    %185 = vmatpush1.bf16.msra.mxu0 %v161
    %186 = vmatprep.subr.bf16.mxu0 0
    %187 = vmatpush1.bf16.msra.mxu0 0
    %188 = vmatprep.subr.bf16.mxu0 0
    %189 = vmatpush1.bf16.msra.mxu0 0
    %190 = vmatprep.subr.bf16.mxu0 0
    %191 = vmatpush1.bf16.msra.mxu0 0
    %192 = vmatprep.subr.bf16.mxu0 0
    %193 = vmatpush1.bf16.msra.mxu0 0
    %194 = vmatprep.subr.bf16.mxu0 0
    %195 = vmatpush1.bf16.msra.mxu0 0
    %196 = vmatprep.subr.bf16.mxu0 0
    %197 = vmatpush1.bf16.msra.mxu0 0
    %198 = vmatprep.subr.bf16.mxu0 0
    %199 = vmatpush1.bf16.msra.mxu0 0
    %200 = vmatprep.subr.bf16.mxu0 0
    %201 = vmatpush1.bf16.msra.mxu0 0
    %202 = vmatprep.mubr.bf16.mxu0 0
    %203 = vmatmul.mubr.bf16.gmra.mrb[0].mxu0 %v105
    %v204 = vpop.f32.mrb[0].mxu0
    %v205 = vadd.f32 0.0, %v204
    %v206 = vpop.f32.mrb[0].mxu0
    %v207 = vpop.f32.mrb[0].mxu0
    %v208 = vadd.f32 0.0, %v207
    %v209 = vpop.f32.mrb[0].mxu0
    %210 = vdwg.mxu0
    %v211 = vadd.f32 %v47, %v205
    %v212 = vadd.f32 %v48, %v208
    %213 = vst [vmem:[#allocation7] sm:$0xff] %v211
    %214 = vst [vmem:[#allocation7 + $0x8] sm:$0xff] %v212
    // Predicated region
    $region26: #{tpu_custom_call.1} parent=1 // pred_check
      _
    $region27: #{tpu_custom_call.1} parent=1 // pred_check_branch
      %216 = sbr.rel (0) target = $region29
    $region28: #{tpu_custom_call.1} parent=1 // pred_region
      %s218 = ssub.s32 256, 256
      %219 = vsyncadd [#allocation4], %s218
      %s220 = sshll.u32 [#allocation7], 4
      %s221 = int_to_ptr.vmem [resolvable:$true] %s220
      %226 = dma.vmem_to_hbm [thread:$0]  %s221, 256, %s4, [#allocation4], 128, 128, 8
    $region29: #{tpu_custom_call.1} parent=1 // pred_fallthru
      _
    // Predicated region
    $region30: #{tpu_custom_call.1} parent=1 // pred_check
      _
    $region31: #{tpu_custom_call.1} parent=1 // pred_check_branch
      %228 = sbr.rel (0) target = $region33
    $region32: #{tpu_custom_call.1} parent=1 // pred_region
      %229 = dma.done [#allocation4], 256
    $region33: #{tpu_custom_call.1} parent=1 // pred_fallthru
      _
    %230 = vsyncpa [#allocation3], 1
    %231 = vsyncpa [#allocation6], 1
    %232 = vsyncpa [#allocation4], 1

</llo_original>
